<compile_context>
chip_gen: v5e
topology: v5e:2x2
jax: 0.10.0
libtpu: 0.0.40
codegen_flags: <defaults>
</compile_context>

<pallas_src>
import functools

import jax
import jax.numpy as jnp
from jax.experimental import pallas as pl
from jax.experimental.pallas import tpu as pltpu

DROPOUT_P = 1.0  # matches `dropout_p = 1` in the PyTorch script (training mode)


def _attn_kernel(seed_ref, inv_ref, q_ref, k_ref, v_ref, o_ref, *, dropout_p):
    # PyTorch F.dropout(p=1, training=True) zeroes everything -> output is 0.
    if dropout_p >= 1.0:
        o_ref[...] = jnp.zeros_like(o_ref)
        return

    b = pl.program_id(0)

    # Fold the per-batch divisor into q before the matmul: one scalar recip +
    # a (Tq, D) multiply instead of a (Tq, S) divide over the score matrix.
    scale = 1.0 / inv_ref[b]
    q = (q_ref[...] * scale).astype(jnp.bfloat16)          # (Tq, D)
    k = k_ref[...].astype(jnp.bfloat16)                    # (S, D)

    # QK^T: contract on D of both operands — MXU consumes K un-transposed.
    s = jax.lax.dot_general(
        q, k, dimension_numbers=(((1,), (1,)), ((), ())),
        preferred_element_type=jnp.float32)                # (Tq, S) f32

    # Unnormalized softmax numerator; normalization deferred past the PV matmul.
    m = jnp.max(s, axis=-1, keepdims=True)
    e = jnp.exp(s - m)                                     # (Tq, S)
    denom = jnp.sum(e, axis=-1, keepdims=True)             # (Tq, 1)
    post_scale = pl.reciprocal(denom, approx=True)         # 1 / row_sum

    if dropout_p > 0.0:
        # Unique stream per (batch, q-tile); compare raw uint32 bits against an
        # integer threshold — no shift / convert, and no arithmetic-shift bias.
        pltpu.prng_seed(seed_ref[0] + b * pl.num_programs(1) + pl.program_id(1))
        bits = pltpu.bitcast(pltpu.prng_random_bits(e.shape), jnp.uint32)
        thresh = jnp.uint32(min(int(round(dropout_p * 4294967296.0)),
                                4294967295))
        e = jnp.where(bits >= thresh, e, 0.0)
        # Fold the 1/(1-p) dropout rescale into the deferred normalization.
        post_scale = post_scale * (1.0 / (1.0 - dropout_p))

    out = jnp.dot(e.astype(jnp.bfloat16), v_ref[...].astype(jnp.bfloat16),
                  preferred_element_type=jnp.float32)      # (Tq, D)
    o_ref[...] = (out * post_scale).astype(o_ref.dtype)


def sdpa_dropout(query, key, value, inv_scale_factor, seed,
                 dropout_p=DROPOUT_P, tq=128):
    B, S, D = query.shape
    tq = min(tq, S)
    assert S % tq == 0
    kernel = functools.partial(_attn_kernel, dropout_p=float(dropout_p))
    return pl.pallas_call(
        kernel,
        out_shape=jax.ShapeDtypeStruct((B, S, D), query.dtype),
        grid_spec=pltpu.PrefetchScalarGridSpec(
            num_scalar_prefetch=1,                          # seed -> SMEM
            grid=(B, S // tq),
            in_specs=[
                pl.BlockSpec(memory_space=pltpu.MemorySpace.SMEM),   # inv (B,)
                pl.BlockSpec((pl.Squeezed(), tq, D),
                             lambda b, qi, seed: (b, qi, 0)),        # query
                pl.BlockSpec((pl.Squeezed(), S, D),
                             lambda b, qi, seed: (b, 0, 0)),         # key
                pl.BlockSpec((pl.Squeezed(), S, D),
                             lambda b, qi, seed: (b, 0, 0)),         # value
            ],
            out_specs=pl.BlockSpec((pl.Squeezed(), tq, D),
                                   lambda b, qi, seed: (b, qi, 0)),
        ),
        compiler_params=pltpu.CompilerParams(
            dimension_semantics=("parallel", "parallel"),
        ),
    )(seed, inv_scale_factor, query, key, value)


if __name__ == "__main__":
    # Small shapes consistent with the module's [3, 512, 128] inputs.
    B, S, D = 3, 256, 128
    k0, k1, k2, k3 = jax.random.split(jax.random.PRNGKey(0), 4)

    query = jax.random.normal(k0, (B, S, D), dtype=jnp.float32)
    key_t = jax.random.normal(k1, (B, S, D), dtype=jnp.float32)
    value = jax.random.normal(k2, (B, S, D), dtype=jnp.float32)
    # NOTE: the original torch.randn(3) divisor does not broadcast against a
    # (3, 512, 512) qk tensor (the reference script is in jit_fail); we keep
    # the per-batch scalar-divisor interpretation (positive for a sane demo).
    inv_scale_factor = jnp.abs(jax.random.normal(k3, (B,), jnp.float32)) * 0.5 + 8.0
    seed = jnp.array([0], dtype=jnp.int32)

    # 1) Spec configuration: dropout_p = 1 -> output must be exactly zero.
    out = sdpa_dropout(query, key_t, value, inv_scale_factor, seed,
                       dropout_p=DROPOUT_P)
    jax.block_until_ready(out)
    assert out.shape == (B, S, D)
    assert bool(jnp.all(out == 0.0))

    # 2) Full attention path (dropout disabled) against a pure-JAX reference.
    out0 = sdpa_dropout(query, key_t, value, inv_scale_factor, seed,
                        dropout_p=0.0)
    jax.block_until_ready(out0)
    s_ref = jnp.einsum("bqd,bkd->bqk", query, key_t) / inv_scale_factor[:, None, None]
    ref = jnp.einsum("bqk,bkd->bqd", jax.nn.softmax(s_ref, axis=-1), value)
    assert jnp.allclose(out0, ref, atol=2e-2, rtol=2e-2), \
        float(jnp.max(jnp.abs(out0 - ref)))

    print("KERNEL_OK")
</pallas_src>

<mosaic_0001>
module attributes {stable_mosaic.version = 11 : i64} {
  func.func @_attn_kernel(%arg0: i32, %arg1: i32, %arg2: memref<1xi32, #tpu.memory_space<smem>>, %arg3: memref<3xf32, #tpu.memory_space<smem>>, %arg4: memref<1x128x128xf32, #tpu.memory_space<vmem>>, %arg5: memref<1x256x128xf32, #tpu.memory_space<vmem>>, %arg6: memref<1x256x128xf32, #tpu.memory_space<vmem>>, %arg7: memref<1x128x128xf32, #tpu.memory_space<vmem>>) attributes {dimension_semantics = [#tpu.dimension_semantics<parallel>, #tpu.dimension_semantics<parallel>], iteration_bounds = array<i64: 3, 2>, scalar_prefetch = 1 : i64, scratch_operands = 0 : i64, tpu.core_type = #tpu.core_type<tc>, window_params = [{transform_indices = @transform_0, window_bounds = array<i64: 3>}, {transform_indices = @transform_1, window_bounds = array<i64: 1, 128, 128>}, {transform_indices = @transform_2, window_bounds = array<i64: 1, 256, 128>}, {transform_indices = @transform_3, window_bounds = array<i64: 1, 256, 128>}, {transform_indices = @transform_4, window_bounds = array<i64: 1, 128, 128>}]} {
    %cst = arith.constant 0.000000e+00 : f32
    %0 = vector.broadcast %cst : f32 to vector<128x128xf32>
    %c0 = arith.constant 0 : index
    %c0_0 = arith.constant 0 : index
    %c0_1 = arith.constant 0 : index
    %1 = vector.load %arg7[%c0, %c0_0, %c0_1] : memref<1x128x128xf32, #tpu.memory_space<vmem>>, vector<1x128x128xf32>
    %2 = vector.shape_cast %1 : vector<1x128x128xf32> to vector<128x128xf32>
    %3 = vector.shape_cast %0 : vector<128x128xf32> to vector<1x128x128xf32>
    tpu.vector_store %arg7[%c0, %c0_0, %c0_1], %3 {strides = array<i32>} : memref<1x128x128xf32, #tpu.memory_space<vmem>>, vector<1x128x128xf32>,
    return
  }
  func.func @transform_0(%arg0: i32, %arg1: i32, %arg2: memref<1xi32, #tpu.memory_space<smem>>) -> i32 {
    %c0_i32 = arith.constant 0 : i32
    %c0_i32_0 = arith.constant 0 : i32
    return %c0_i32 : i32
  }
  func.func @transform_1(%arg0: i32, %arg1: i32, %arg2: memref<1xi32, #tpu.memory_space<smem>>) -> (i32, i32, i32) {
    %c0_i32 = arith.constant 0 : i32
    %c0_i32_0 = arith.constant 0 : i32
    return %arg0, %arg1, %c0_i32 : i32, i32, i32
  }
  func.func @transform_2(%arg0: i32, %arg1: i32, %arg2: memref<1xi32, #tpu.memory_space<smem>>) -> (i32, i32, i32) {
    %c0_i32 = arith.constant 0 : i32
    %c0_i32_0 = arith.constant 0 : i32
    %c0_i32_1 = arith.constant 0 : i32
    return %arg0, %c0_i32, %c0_i32_0 : i32, i32, i32
  }
  func.func @transform_3(%arg0: i32, %arg1: i32, %arg2: memref<1xi32, #tpu.memory_space<smem>>) -> (i32, i32, i32) {
    %c0_i32 = arith.constant 0 : i32
    %c0_i32_0 = arith.constant 0 : i32
    %c0_i32_1 = arith.constant 0 : i32
    return %arg0, %c0_i32, %c0_i32_0 : i32, i32, i32
  }
  func.func @transform_4(%arg0: i32, %arg1: i32, %arg2: memref<1xi32, #tpu.memory_space<smem>>) -> (i32, i32, i32) {
    %c0_i32 = arith.constant 0 : i32
    %c0_i32_0 = arith.constant 0 : i32
    return %arg0, %arg1, %c0_i32 : i32, i32, i32
  }
}

</mosaic_0001>

<llo_original>
// kernel: tpu_custom_call.1
$region0: #{tpu_custom_call.1}
  #allocation0 [shape = 'u32[]', space=smem, size = 0x4, offset = 0x4, fixed_abs, tag = 'smem constant byte address 0x4 - core index']
  #allocation1 [shape = 'u32[72,128]{1,0:T(1,128)}', space=vmem, size = 0x9000, scoped, tag = 'internal scratch']
  #allocation2 [shape = 's32[1]{0}', space=sflag, size = 0x4, scoped, tag = 'scoped memory for tpu_custom_call.1']
  #allocation3 [shape = 's32[1]{0:T(128)S(6)}', space=smem, size = 0x200, scoped, tag = 'prefetched SMEM operand 0']
  %s0 = inlined_call_operand.<no memory space> [shape: s32[1], index: 0, kind: input, shape index: {}]
  %s1 = inlined_call_operand.vmem [shape: f32[3], index: 1, kind: input, shape index: {}]
  %s2 = inlined_call_operand.hbm [shape: f32[3,256,128], index: 2, kind: input, shape index: {}]
  %s3 = inlined_call_operand.hbm [shape: f32[3,256,128], index: 3, kind: input, shape index: {}]
  %s4 = inlined_call_operand.hbm [shape: f32[3,256,128], index: 4, kind: input, shape index: {}]
  %s5 = inlined_call_operand.hbm [shape: f32[3,256,128], index: 5, kind: output, shape index: {}]
  %s6 = sld [smem:[#allocation0]]
  $region65: #{tpu_custom_call.1} parent=0
    _
  %s8 = ssub.s32 1, %s6
  %s9 = scalar_select 0, %s8, %s6
  %10 = sst [smem:[#allocation3]] %s0
  $region1: #{tpu_custom_call.1} parent=0
    #allocation4 [shape = 'u8[512]{0}', space=smem, size = 0x200, scoped, tag = 'input window, operand 1, single buffered']
    #allocation5 [shape = 's32[2]{0}', space=sflag, size = 0x8, scoped, tag = 'scoped memory for tpu_custom_call.1']
    #allocation6 [shape = 's32[2]{0}', space=sflag, size = 0x8, scoped, tag = 'scoped memory for tpu_custom_call.1']
    #allocation7 [shape = 's32[2]{0}', space=sflag, size = 0x8, scoped, tag = 'scoped memory for tpu_custom_call.1']
    #allocation8 [shape = 'u8[131072]{0}', space=vmem, size = 0x20000, scoped, tag = 'input window, operand 2']
    #allocation9 [shape = 'u8[262144]{0}', space=vmem, size = 0x40000, scoped, tag = 'input window, operand 3']
    #allocation10 [shape = 's32[2]{0}', space=sflag, size = 0x8, scoped, tag = 'scoped memory for tpu_custom_call.1']
    #allocation11 [shape = 'u8[262144]{0}', space=vmem, size = 0x40000, scoped, tag = 'input window, operand 4']
    #allocation12 [shape = 'u8[131072]{0}', space=vmem, size = 0x20000, scoped, tag = 'output window, operand 0']
    %11 = vsyncpa [#allocation7], 0
    %12 = vsyncpa [#allocation5], 0
    %s13 = scalar_lea.sflag [#allocation5], 1
    %14 = vsyncpa %s13, 0
    %15 = vsyncpa [#allocation10], 0
    %s16 = scalar_lea.sflag [#allocation10], 1
    %17 = vsyncpa %s16, 0
    %18 = vsyncpa [#allocation6], 0
    %s19 = scalar_lea.sflag [#allocation6], 1
    %20 = vsyncpa %s19, 0
    loop: start=0, step=1, limit=8
    $region2: #{tpu_custom_call.1} parent=1 // loop_pre_header
      _
    $region3: #{tpu_custom_call.1} parent=1 // loop_header
      %s22 = sphi 0, %s26
      %p23 = scmp.ge.s32.totalorder %s22, 8
      %s29 = sphi 0, %s41
      %s30 = sphi 0, %s37
      %s31 = sphi 0, %s29
      %s32 = sphi 0, %s30
      %s33 = sphi 0, %s31
      %s34 = sphi 0, %s32
      %s42 = sphi 0, %s42
      %s44 = sphi 0, %s42
      %s45 = sphi 0, %s44
      %s59 = sphi 0, %s45
      %s67 = sphi 0, %s69
      %s70 = sphi 0, %s67
      %s71 = sphi 0, %s70
      %s87 = sphi 0, %s71
      %s93 = sphi 0, %s95
      %s96 = sphi 0, %s93
      %s97 = sphi 0, %s96
      %s113 = sphi 0, %s97
      %s119 = sphi 0, %s121
      %s122 = sphi 0, %s119
      %s123 = sphi 0, %s122
      %s139 = sphi 0, %s123
      %s147 = sphi 0, %s149
      %s150 = sphi 0, %s147
      %s151 = sphi 0, %s150
      %s167 = sphi 0, %s151
    $region4: #{tpu_custom_call.1} parent=1 // loop_header_branch
      %25 = sbr.rel (%p23) target = $region8
    $region5: #{tpu_custom_call.1} parent=1 // loop_body
      %s27 = ssub.s32 %s22, 1
      %s28 = ssub.s32 %s22, 2
      %s35 = sadd.s32 1, %s30
      %p36 = scmp.ge.s32.totalorder %s35, 2
      %s37 = scalar_select %p36, 0, %s35
      %s38 = sadd.s32 1, %s29
      %s39 = scalar_select %p36, %s38, %s29
      %p40 = scmp.ge.s32.totalorder %s39, 3
      %s41 = scalar_select %p40, 0, %s39
      %s43 = sadd.s32 %s42, 1
      %p46 = scmp.eq.s32.totalorder %s22, 5
      %p47 = scmp.ne.s32.totalorder %s42, %s44
      %p48 = scmp.eq.s32.totalorder %s22, 0
      %p49 = por %p47, %p48
      %p50 = scmp.ne.s32.totalorder %s42, %s44
      %p51 = scmp.eq.s32.totalorder %s27, 5
      %p52 = por %p50, %p51
      %p53 = scmp.ne.s32.totalorder %s44, %s45
      %p54 = scmp.eq.s32.totalorder %s27, 0
      %p55 = por %p53, %p54
      %p56 = scmp.ne.s32.totalorder %s44, %s45
      %p57 = scmp.eq.s32.totalorder %s28, 5
      %p58 = por %p56, %p57
      %p60 = scmp.ne.s32.totalorder %s45, %s59
      %p61 = scmp.eq.s32.totalorder %s28, 0
      %p62 = por %p60, %p61
      %s63 = ssub.s32 %s29, %s41
      %s64 = ssub.s32 %s30, %s37
      %s65 = sor.u32 %s63, %s64
      %p66 = scmp.eq.s32.totalorder %s65, 0
      %s68 = sadd.s32 %s67, 1
      %s69 = scalar_select %p66, %s67, %s68
      %p72 = pneg %p66
      %p73 = scmp.eq.s32.totalorder %s22, 5
      %p74 = por %p72, %p73
      %p75 = scmp.ne.s32.totalorder %s67, %s70
      %p76 = scmp.eq.s32.totalorder %s22, 0
      %p77 = por %p75, %p76
      %p78 = scmp.ne.s32.totalorder %s67, %s70
      %p79 = scmp.eq.s32.totalorder %s27, 5
      %p80 = por %p78, %p79
      %p81 = scmp.ne.s32.totalorder %s70, %s71
      %p82 = scmp.eq.s32.totalorder %s27, 0
      %p83 = por %p81, %p82
      %p84 = scmp.ne.s32.totalorder %s70, %s71
      %p85 = scmp.eq.s32.totalorder %s28, 5
      %p86 = por %p84, %p85
      %p88 = scmp.ne.s32.totalorder %s71, %s87
      %p89 = scmp.eq.s32.totalorder %s28, 0
      %p90 = por %p88, %p89
      %s91 = ssub.s32 %s29, %s41
      %p92 = scmp.eq.s32.totalorder %s91, 0
      %s94 = sadd.s32 %s93, 1
      %s95 = scalar_select %p92, %s93, %s94
      %p98 = pneg %p92
      %p99 = scmp.eq.s32.totalorder %s22, 5
      %p100 = por %p98, %p99
      %p101 = scmp.ne.s32.totalorder %s93, %s96
      %p102 = scmp.eq.s32.totalorder %s22, 0
      %p103 = por %p101, %p102
      %p104 = scmp.ne.s32.totalorder %s93, %s96
      %p105 = scmp.eq.s32.totalorder %s27, 5
      %p106 = por %p104, %p105
      %p107 = scmp.ne.s32.totalorder %s96, %s97
      %p108 = scmp.eq.s32.totalorder %s27, 0
      %p109 = por %p107, %p108
      %p110 = scmp.ne.s32.totalorder %s96, %s97
      %p111 = scmp.eq.s32.totalorder %s28, 5
      %p112 = por %p110, %p111
      %p114 = scmp.ne.s32.totalorder %s97, %s113
      %p115 = scmp.eq.s32.totalorder %s28, 0
      %p116 = por %p114, %p115
      %s117 = ssub.s32 %s29, %s41
      %p118 = scmp.eq.s32.totalorder %s117, 0
      %s120 = sadd.s32 %s119, 1
      %s121 = scalar_select %p118, %s119, %s120
      %p124 = pneg %p118
      %p125 = scmp.eq.s32.totalorder %s22, 5
      %p126 = por %p124, %p125
      %p127 = scmp.ne.s32.totalorder %s119, %s122
      %p128 = scmp.eq.s32.totalorder %s22, 0
      %p129 = por %p127, %p128
      %p130 = scmp.ne.s32.totalorder %s119, %s122
      %p131 = scmp.eq.s32.totalorder %s27, 5
      %p132 = por %p130, %p131
      %p133 = scmp.ne.s32.totalorder %s122, %s123
      %p134 = scmp.eq.s32.totalorder %s27, 0
      %p135 = por %p133, %p134
      %p136 = scmp.ne.s32.totalorder %s122, %s123
      %p137 = scmp.eq.s32.totalorder %s28, 5
      %p138 = por %p136, %p137
      %p140 = scmp.ne.s32.totalorder %s123, %s139
      %p141 = scmp.eq.s32.totalorder %s28, 0
      %p142 = por %p140, %p141
      %s143 = ssub.s32 %s29, %s41
      %s144 = ssub.s32 %s30, %s37
      %s145 = sor.u32 %s143, %s144
      %p146 = scmp.eq.s32.totalorder %s145, 0
      %s148 = sadd.s32 %s147, 1
      %s149 = scalar_select %p146, %s147, %s148
      %p152 = pneg %p146
      %p153 = scmp.eq.s32.totalorder %s22, 5
      %p154 = por %p152, %p153
      %p155 = scmp.ne.s32.totalorder %s147, %s150
      %p156 = scmp.eq.s32.totalorder %s22, 0
      %p157 = por %p155, %p156
      %p158 = scmp.ne.s32.totalorder %s147, %s150
      %p159 = scmp.eq.s32.totalorder %s27, 5
      %p160 = por %p158, %p159
      %p161 = scmp.ne.s32.totalorder %s150, %s151
      %p162 = scmp.eq.s32.totalorder %s27, 0
      %p163 = por %p161, %p162
      %p164 = scmp.ne.s32.totalorder %s150, %s151
      %p165 = scmp.eq.s32.totalorder %s28, 5
      %p166 = por %p164, %p165
      %p168 = scmp.ne.s32.totalorder %s151, %s167
      %p169 = scmp.eq.s32.totalorder %s28, 0
      %p170 = por %p168, %p169
      %p171 = scmp.le.s32.totalorder 1, %s22
      %p172 = scmp.lt.s32.totalorder %s22, 7
      %p173 = pnand %p171, %p172
      %p174 = pneg %p173
      // Predicated region
      $region9: #{tpu_custom_call.1} parent=5 // pred_check
        _
      $region10: #{tpu_custom_call.1} parent=5 // pred_check_branch
        %176 = sbr.rel (%p173) target = $region12
      $region11: #{tpu_custom_call.1} parent=5 // pred_region
        %s177 = ssub.s32 %s22, 1
        // Predicated region
        $region13: #{tpu_custom_call.1} parent=11 // pred_check
          %p178 = pneg %p55
        $region14: #{tpu_custom_call.1} parent=11 // pred_check_branch
          %180 = sbr.rel (%p178) target = $region16
        $region15: #{tpu_custom_call.1} parent=11 // pred_region
          %182 = vsyncadd [#allocation7], 0
          %s184 = sshll.u32 %s1, 4
          %s185 = int_to_ptr.vmem [resolvable:$true] %s184
          %187 = dma.vmem_to_smem %s185, 16, [#allocation4], [#allocation7]
        $region16: #{tpu_custom_call.1} parent=11 // pred_fallthru
          _
      $region12: #{tpu_custom_call.1} parent=5 // pred_fallthru
        _
      %p188 = scmp.lt.s32.totalorder %s22, 6
      // Predicated region
      $region17: #{tpu_custom_call.1} parent=5 // pred_check
        %p189 = pneg %p188
      $region18: #{tpu_custom_call.1} parent=5 // pred_check_branch
        %191 = sbr.rel (%p189) target = $region20
      $region19: #{tpu_custom_call.1} parent=5 // pred_region
        // Predicated region
        $region21: #{tpu_custom_call.1} parent=19 // pred_check
          %p192 = pneg %p77
        $region22: #{tpu_custom_call.1} parent=19 // pred_check_branch
          %194 = sbr.rel (%p192) target = $region24
        $region23: #{tpu_custom_call.1} parent=19 // pred_region
          %s195 = sand.u32 %s67, 1
          %s196 = scalar_lea.sflag [#allocation5], %s195
          %s197 = sand.u32 %s67, 1
          %s198 = smul.addr %s197, 128
          %s199 = scalar_lea.vmem [#allocation8], %s198
          %s200 = smul.u32 16, %s30
          %202 = vsyncadd %s196, 0
          %s203 = smul.addr %s29, 32
          %s204 = sadd.s32 %s200, %s203
          %s205 = smul.addr %s204, 8
          %s206 = scalar_lea.hbm %s2, %s205
          %s207 = sshll.u32 %s206, 4
          %s208 = int_to_ptr.hbm [resolvable:$true] %s207
          %s209 = sshll.u32 %s199, 4
          %s210 = int_to_ptr.vmem [resolvable:$true] %s209
          %215 = dma.hbm_to_vmem [thread:$0]  %s208, 2048, %s210, %s196, 128, 128, 8
        $region24: #{tpu_custom_call.1} parent=19 // pred_fallthru
          _
        // Predicated region
        $region25: #{tpu_custom_call.1} parent=19 // pred_check
          %p216 = pneg %p103
        $region26: #{tpu_custom_call.1} parent=19 // pred_check_branch
          %218 = sbr.rel (%p216) target = $region28
        $region27: #{tpu_custom_call.1} parent=19 // pred_region
          %s219 = sand.u32 %s22, 1
          %s220 = scalar_lea.sflag [#allocation10], %s219
          %s221 = sand.u32 %s93, 1
          %s222 = smul.addr %s221, 256
          %s223 = scalar_lea.vmem [#allocation9], %s222
          %225 = vsyncadd %s220, 0
          %s226 = smul.addr %s29, 32
          %s227 = smul.addr %s226, 8
          %s228 = scalar_lea.hbm %s3, %s227
          %s229 = sshll.u32 %s228, 4
          %s230 = int_to_ptr.hbm [resolvable:$true] %s229
          %s231 = sshll.u32 %s223, 4
          %s232 = int_to_ptr.vmem [resolvable:$true] %s231
          %237 = dma.hbm_to_vmem [thread:$0]  %s230, 4096, %s232, %s220, 128, 128, 8
        $region28: #{tpu_custom_call.1} parent=19 // pred_fallthru
          _
        // Predicated region
        $region29: #{tpu_custom_call.1} parent=19 // pred_check
          %p238 = pneg %p129
        $region30: #{tpu_custom_call.1} parent=19 // pred_check_branch
          %240 = sbr.rel (%p238) target = $region32
        $region31: #{tpu_custom_call.1} parent=19 // pred_region
          %s241 = sand.u32 %s22, 1
          %s242 = scalar_lea.sflag [#allocation10], %s241
          %s243 = sand.u32 %s119, 1
          %s244 = smul.addr %s243, 256
          %s245 = scalar_lea.vmem [#allocation11], %s244
          %247 = vsyncadd %s242, 0
          %s248 = smul.addr %s29, 32
          %s249 = smul.addr %s248, 8
          %s250 = scalar_lea.hbm %s4, %s249
          %s251 = sshll.u32 %s250, 4
          %s252 = int_to_ptr.hbm [resolvable:$true] %s251
          %s253 = sshll.u32 %s245, 4
          %s254 = int_to_ptr.vmem [resolvable:$true] %s253
          %259 = dma.hbm_to_vmem [thread:$0]  %s252, 4096, %s254, %s242, 128, 128, 8
        $region32: #{tpu_custom_call.1} parent=19 // pred_fallthru
          _
      $region20: #{tpu_custom_call.1} parent=5 // pred_fallthru
        _
      %p260 = scmp.le.s32.totalorder 1, %s22
      %p261 = scmp.lt.s32.totalorder %s22, 7
      %p262 = pnand %p260, %p261
      %p263 = pneg %p262
      // Predicated region
      $region33: #{tpu_custom_call.1} parent=5 // pred_check
        _
      $region34: #{tpu_custom_call.1} parent=5 // pred_check_branch
        %265 = sbr.rel (%p262) target = $region36
      $region35: #{tpu_custom_call.1} parent=5 // pred_region
        %s266 = ssub.s32 %s22, 1
        // Predicated region
        $region37: #{tpu_custom_call.1} parent=35 // pred_check
          %p267 = pneg %p55
        $region38: #{tpu_custom_call.1} parent=35 // pred_check_branch
          %269 = sbr.rel (%p267) target = $region40
        $region39: #{tpu_custom_call.1} parent=35 // pred_region
          %271 = dma.done [#allocation7], 16
        $region40: #{tpu_custom_call.1} parent=35 // pred_fallthru
          _
        %s272 = sand.u32 %s70, 1
        %s273 = scalar_lea.sflag [#allocation5], %s272
        %s274 = sand.u32 %s70, 1
        %s275 = smul.addr %s274, 128
        %s276 = scalar_lea.vmem [#allocation8], %s275
        // Predicated region
        $region41: #{tpu_custom_call.1} parent=35 // pred_check
          %p277 = pneg %p83
        $region42: #{tpu_custom_call.1} parent=35 // pred_check_branch
          %279 = sbr.rel (%p277) target = $region44
        $region43: #{tpu_custom_call.1} parent=35 // pred_region
          %281 = dma.done %s273, 2048
        $region44: #{tpu_custom_call.1} parent=35 // pred_fallthru
          _
        %s282 = sand.u32 %s27, 1
        %s283 = scalar_lea.sflag [#allocation10], %s282
        %s284 = sand.u32 %s96, 1
        %s285 = smul.addr %s284, 256
        %s286 = scalar_lea.vmem [#allocation9], %s285
        // Predicated region
        $region45: #{tpu_custom_call.1} parent=35 // pred_check
          %p287 = pneg %p109
        $region46: #{tpu_custom_call.1} parent=35 // pred_check_branch
          %289 = sbr.rel (%p287) target = $region48
        $region47: #{tpu_custom_call.1} parent=35 // pred_region
          %291 = dma.done %s283, 4096
        $region48: #{tpu_custom_call.1} parent=35 // pred_fallthru
          _
        %s292 = sand.u32 %s27, 1
        %s293 = scalar_lea.sflag [#allocation10], %s292
        %s294 = sand.u32 %s122, 1
        %s295 = smul.addr %s294, 256
        %s296 = scalar_lea.vmem [#allocation11], %s295
        // Predicated region
        $region49: #{tpu_custom_call.1} parent=35 // pred_check
          %p297 = pneg %p135
        $region50: #{tpu_custom_call.1} parent=35 // pred_check_branch
          %299 = sbr.rel (%p297) target = $region52
        $region51: #{tpu_custom_call.1} parent=35 // pred_region
          %301 = dma.done %s293, 4096
        $region52: #{tpu_custom_call.1} parent=35 // pred_fallthru
          _
        %302 = sfence
        %p303 = pneg %p55
        %p304 = pneg %p52
        %s305 = sand.u32 %s70, 1
        %s306 = scalar_lea.sflag [#allocation5], %s305
        %s307 = sand.u32 %s70, 1
        %s308 = smul.addr %s307, 128
        %s309 = scalar_lea.vmem [#allocation8], %s308
        %p310 = pneg %p83
        %p311 = pneg %p80
        %s312 = sand.u32 %s27, 1
        %s313 = scalar_lea.sflag [#allocation10], %s312
        %s314 = sand.u32 %s96, 1
        %s315 = smul.addr %s314, 256
        %s316 = scalar_lea.vmem [#allocation9], %s315
        %p317 = pneg %p109
        %p318 = pneg %p106
        %s319 = sand.u32 %s27, 1
        %s320 = scalar_lea.sflag [#allocation10], %s319
        %s321 = sand.u32 %s122, 1
        %s322 = smul.addr %s321, 256
        %s323 = scalar_lea.vmem [#allocation11], %s322
        %p324 = pneg %p135
        %p325 = pneg %p132
        %p326 = pneg %p163
        %p327 = pneg %p160
        %s328 = sand.u32 %s150, 1
        %s329 = scalar_lea.sflag [#allocation6], %s328
        %s330 = sand.u32 %s150, 1
        %s331 = smul.addr %s330, 128
        %s332 = scalar_lea.vmem [#allocation12], %s331
        %s333 = smul.u32 16, %s32
        %s334 = smul.u32 16, %s32
        %335 = vst [vmem:[%s332] sm:$0xff] 0.0
        %336 = vst [vmem:[%s332 + $0x8] sm:$0xff] 0.0
        %337 = vst [vmem:[%s332 + $0x10] sm:$0xff] 0.0
        %338 = vst [vmem:[%s332 + $0x18] sm:$0xff] 0.0
        %339 = vst [vmem:[%s332 + $0x20] sm:$0xff] 0.0
        %340 = vst [vmem:[%s332 + $0x28] sm:$0xff] 0.0
        %341 = vst [vmem:[%s332 + $0x30] sm:$0xff] 0.0
        %342 = vst [vmem:[%s332 + $0x38] sm:$0xff] 0.0
        %343 = vst [vmem:[%s332 + $0x40] sm:$0xff] 0.0
        %344 = vst [vmem:[%s332 + $0x48] sm:$0xff] 0.0
        %345 = vst [vmem:[%s332 + $0x50] sm:$0xff] 0.0
        %346 = vst [vmem:[%s332 + $0x58] sm:$0xff] 0.0
        %347 = vst [vmem:[%s332 + $0x60] sm:$0xff] 0.0
        %348 = vst [vmem:[%s332 + $0x68] sm:$0xff] 0.0
        %349 = vst [vmem:[%s332 + $0x70] sm:$0xff] 0.0
        %350 = vst [vmem:[%s332 + $0x78] sm:$0xff] 0.0
        %s351 = sand.u32 %s150, 1
        %s352 = scalar_lea.sflag [#allocation6], %s351
        %s353 = sand.u32 %s150, 1
        %s354 = smul.addr %s353, 128
        %s355 = scalar_lea.vmem [#allocation12], %s354
        // Predicated region
        $region53: #{tpu_custom_call.1} parent=35 // pred_check
          %p356 = pneg %p160
        $region54: #{tpu_custom_call.1} parent=35 // pred_check_branch
          %358 = sbr.rel (%p356) target = $region56
        $region55: #{tpu_custom_call.1} parent=35 // pred_region
          %s359 = smul.u32 16, %s32
          %361 = vsyncadd %s352, 0
          %s362 = smul.addr %s31, 32
          %s363 = sadd.s32 %s359, %s362
          %s364 = smul.addr %s363, 8
          %s365 = scalar_lea.hbm %s5, %s364
          %s366 = sshll.u32 %s355, 4
          %s367 = int_to_ptr.vmem [resolvable:$true] %s366
          %s368 = sshll.u32 %s365, 4
          %s369 = int_to_ptr.hbm [resolvable:$true] %s368
          %374 = dma.vmem_to_hbm [thread:$0]  %s367, 2048, %s369, %s352, 128, 128, 8
        $region56: #{tpu_custom_call.1} parent=35 // pred_fallthru
          _
      $region36: #{tpu_custom_call.1} parent=5 // pred_fallthru
        _
      %p375 = scmp.le.s32.totalorder 2, %s22
      // Predicated region
      $region57: #{tpu_custom_call.1} parent=5 // pred_check
        %p376 = pneg %p375
      $region58: #{tpu_custom_call.1} parent=5 // pred_check_branch
        %378 = sbr.rel (%p376) target = $region60
      $region59: #{tpu_custom_call.1} parent=5 // pred_region
        %s379 = ssub.s32 %s22, 2
        // Predicated region
        $region61: #{tpu_custom_call.1} parent=59 // pred_check
          %p380 = pneg %p166
        $region62: #{tpu_custom_call.1} parent=59 // pred_check_branch
          %382 = sbr.rel (%p380) target = $region64
        $region63: #{tpu_custom_call.1} parent=59 // pred_region
          %s383 = sand.u32 %s151, 1
          %s384 = scalar_lea.sflag [#allocation6], %s383
          %s385 = sand.u32 %s151, 1
          %s386 = smul.addr %s385, 128
          %s387 = scalar_lea.vmem [#allocation12], %s386
          %389 = dma.done %s384, 2048
        $region64: #{tpu_custom_call.1} parent=59 // pred_fallthru
          _
      $region60: #{tpu_custom_call.1} parent=5 // pred_fallthru
        _
    $region6: #{tpu_custom_call.1} parent=1 // loop_footer
      %s26 = sadd.s32 1, %s22
    $region7: #{tpu_custom_call.1} parent=1 // loop_footer_branch
      %21 = sbr.rel target = $region3
    $region8: #{tpu_custom_call.1} parent=1 // loop_exit
      _
    %390 = vsyncpa [#allocation5], 1
    %s391 = scalar_lea.sflag [#allocation5], 1
    %392 = vsyncpa %s391, 1
    %393 = vsyncpa [#allocation10], 1
    %s394 = scalar_lea.sflag [#allocation10], 1
    %395 = vsyncpa %s394, 1
    %396 = vsyncpa [#allocation6], 1
    %s397 = scalar_lea.sflag [#allocation6], 1
    %398 = vsyncpa %s397, 1
    %399 = vsyncpa [#allocation7], 1
    %s400 = scalar_lea.sflag [#allocation7], 1
    %401 = vsyncpa %s400, 1

</llo_original>
